<compile_context>
chip_gen: v7x
topology: tpu7x:2x2x1
jax: 0.10.0
libtpu: 0.0.40
codegen_flags: <defaults>
</compile_context>

<pallas_src>
import jax
import jax.numpy as jnp
from jax import lax
from jax.experimental import pallas as pl
from jax.experimental.pallas import tpu as pltpu


def _upconv_kernel(x_ref, w_ref, b_ref, o_ref):
    # x_ref: (Cin, Hin*Win)      f32  -- one batch element, native NCHW layout
    # w_ref: (Cin, K*K*Cout)     bf16 -- column order (ky, kx, co); VMEM-resident
    # b_ref: (1,  K*K*Cout)      f32  -- VMEM-resident
    # o_ref: (Hin*Win, K*K*Cout) f32
    x_b = x_ref[...].astype(jnp.bfloat16)            # VMEM-side cast, no HBM round trip
    y = lax.dot_general(                             # (Hin*Win, K*K*Cout) on the MXU
        x_b, w_ref[...],
        dimension_numbers=(((0,), (0,)), ((), ())),  # contract Cin (transposed-LHS matmul)
        preferred_element_type=jnp.float32)
    o_ref[...] = y + b_ref[...]


def upconv_woskip_forward(x_nchw, w, b, stride):
    """Forward of UpConv_woskip: ConvTranspose2d(kernel=stride, pad=0, stride=stride)."""
    N, Cin, Hin, Win = x_nchw.shape
    w_cin, Cout, K, K2 = w.shape
    assert (w_cin, K, K2) == (Cin, stride, stride)
    Hout, Wout = Hin * K, Win * K
    HW, KKC = Hin * Win, K * K * Cout

    # Boundary glue is layout-only and cheap:
    #   * x: free reshape only (no transpose, no cast)  -> no extra HBM traffic.
    #   * w: (Cin,Cout,K,K) -> (Cin, K*K*Cout) with (ky,kx,co) column order, bf16 (tiny).
    #   * b: tiled so each (ky,kx) slab gets the per-channel bias.
    x3d = x_nchw.reshape(N, Cin, HW)
    w_flat = jnp.transpose(w, (0, 2, 3, 1)).reshape(Cin, KKC).astype(jnp.bfloat16)
    b_flat = jnp.tile(b.astype(jnp.float32), K * K).reshape(1, KKC)

    y = pl.pallas_call(
        _upconv_kernel,
        out_shape=jax.ShapeDtypeStruct((N, HW, KKC), jnp.float32),
        grid_spec=pltpu.PrefetchScalarGridSpec(
            num_scalar_prefetch=0,
            grid=(N,),
            in_specs=[
                # per-batch-element input slab, batch dim squeezed away in-kernel
                pl.BlockSpec((pl.Squeezed(), Cin, HW), lambda n: (n, 0, 0)),
                # weight / bias: same block every step -> stay resident in VMEM
                pl.BlockSpec((Cin, KKC), lambda n: (0, 0)),
                pl.BlockSpec((1, KKC), lambda n: (0, 0)),
            ],
            out_specs=pl.BlockSpec((pl.Squeezed(), HW, KKC), lambda n: (n, 0, 0)),
        ),
        compiler_params=pltpu.CompilerParams(
            # batch axis is independent -> megacore split on v7x, no-op on v5e/v6e
            dimension_semantics=("parallel",)),
    )(x3d, w_flat, b_flat)

    # Fold the pixel -> KxK patch interleave into the one output transpose that was
    # needed anyway for NHWC->NCHW.  Columns are (ky, kx, co); rows are (i, j):
    #   y[n, i*Win + j, (ky*K + kx)*Cout + co] == out[n, co, i*K+ky, j*K+kx]
    out = y.reshape(N, Hin, Win, K, K, Cout)
    out = jnp.transpose(out, (0, 5, 1, 3, 2, 4))     # (N, Cout, Hin, K, Win, K)
    return out.reshape(N, Cout, Hout, Wout)


# ---------------------------------------------------------------------------
# Pure-JAX (XLA) reference for correctness checking.
# ---------------------------------------------------------------------------
def reference_forward(x_nchw, w, b, stride):
    K = stride
    y = jnp.einsum("ncij,cokl->nikjlo", x_nchw, w,
                   precision=jax.lax.Precision.HIGHEST)
    N, Hin, _, Win, _, Cout = y.shape
    y = y.reshape(N, Hin * K, Win * K, Cout) + b[None, None, None, :]
    return jnp.transpose(y, (0, 3, 1, 2))


if __name__ == "__main__":
    key = jax.random.PRNGKey(0)
    kx, kw, kb = jax.random.split(key, 3)

    # UpConv_woskip(in_channels=128, out_channels=64, kernel_size=3, padding=1, stride=2)
    #   -> ConvTranspose2d(128, 64, kernel_size=2, padding=0, stride=2)
    N, Cin, H, W = 2, 128, 16, 16
    Cout, stride = 64, 2

    x = jax.random.normal(kx, (N, Cin, H, W), jnp.float32)
    w = jax.random.normal(kw, (Cin, Cout, stride, stride), jnp.float32) / jnp.sqrt(float(Cin))
    b = 0.1 * jax.random.normal(kb, (Cout,), jnp.float32)

    fwd = jax.jit(lambda x, w, b: upconv_woskip_forward(x, w, b, stride))
    out = jax.block_until_ready(fwd(x, w, b))

    ref = reference_forward(x, w, b, stride)
    assert out.shape == (N, Cout, H * stride, W * stride), out.shape
    max_err = float(jnp.max(jnp.abs(out - ref)))
    assert jnp.allclose(out, ref, atol=5e-2, rtol=5e-2), max_err
    print("KERNEL_OK")
</pallas_src>

<mosaic_0001>
module attributes {stable_mosaic.version = 11 : i64} {
  func.func @_upconv_kernel(%arg0: i32, %arg1: memref<1x128x256xf32, #tpu.memory_space<vmem>>, %arg2: memref<128x256xbf16, #tpu.memory_space<vmem>>, %arg3: memref<1x256xf32, #tpu.memory_space<vmem>>, %arg4: memref<1x256x256xf32, #tpu.memory_space<vmem>>) attributes {dimension_semantics = [#tpu.dimension_semantics<parallel>], iteration_bounds = array<i64: 2>, scalar_prefetch = 0 : i64, scratch_operands = 0 : i64, tpu.core_type = #tpu.core_type<tc>, window_params = [{transform_indices = @transform_0, window_bounds = array<i64: 1, 128, 256>}, {pipeline_mode = #tpu.pipeline_mode<synchronous>, transform_indices = @transform_1, window_bounds = array<i64: 128, 256>}, {pipeline_mode = #tpu.pipeline_mode<synchronous>, transform_indices = @transform_2, window_bounds = array<i64: 1, 256>}, {transform_indices = @transform_3, window_bounds = array<i64: 1, 256, 256>}]} {
    %c0 = arith.constant 0 : index
    %c0_0 = arith.constant 0 : index
    %c0_1 = arith.constant 0 : index
    %0 = vector.load %arg1[%c0, %c0_0, %c0_1] : memref<1x128x256xf32, #tpu.memory_space<vmem>>, vector<1x128x256xf32>
    %1 = vector.shape_cast %0 : vector<1x128x256xf32> to vector<128x256xf32>
    %2 = arith.truncf %1 : vector<128x256xf32> to vector<128x256xbf16>
    %c0_2 = arith.constant 0 : index
    %c0_3 = arith.constant 0 : index
    %3 = vector.load %arg2[%c0_2, %c0_3] : memref<128x256xbf16, #tpu.memory_space<vmem>>, vector<128x256xbf16>
    %cst = arith.constant dense<0.000000e+00> : vector<256x256xf32>
    %4 = tpu.matmul %2, %3, %cst {dimension_numbers = #tpu.dot_dimension_numbers<[0], [0], [1], [1], [0, 1, 1, 1], [], []>} : vector<128x256xbf16>, vector<128x256xbf16>, vector<256x256xf32> -> vector<256x256xf32>
    %c0_4 = arith.constant 0 : index
    %c0_5 = arith.constant 0 : index
    %5 = vector.load %arg3[%c0_4, %c0_5] : memref<1x256xf32, #tpu.memory_space<vmem>>, vector<1x256xf32>
    %6 = vector.broadcast %5 : vector<1x256xf32> to vector<256x256xf32>
    %7 = arith.addf %4, %6 : vector<256x256xf32>
    %c0_6 = arith.constant 0 : index
    %c0_7 = arith.constant 0 : index
    %c0_8 = arith.constant 0 : index
    %8 = vector.load %arg4[%c0_6, %c0_7, %c0_8] : memref<1x256x256xf32, #tpu.memory_space<vmem>>, vector<1x256x256xf32>
    %9 = vector.shape_cast %8 : vector<1x256x256xf32> to vector<256x256xf32>
    %10 = vector.shape_cast %7 : vector<256x256xf32> to vector<1x256x256xf32>
    tpu.vector_store %arg4[%c0_6, %c0_7, %c0_8], %10 {strides = array<i32>} : memref<1x256x256xf32, #tpu.memory_space<vmem>>, vector<1x256x256xf32>,
    return
  }
  func.func @transform_0(%arg0: i32) -> (i32, i32, i32) {
    %c0_i32 = arith.constant 0 : i32
    %c0_i32_0 = arith.constant 0 : i32
    %c0_i32_1 = arith.constant 0 : i32
    return %arg0, %c0_i32, %c0_i32_0 : i32, i32, i32
  }
  func.func @transform_1(%arg0: i32) -> (i32, i32) {
    %c0_i32 = arith.constant 0 : i32
    %c0_i32_0 = arith.constant 0 : i32
    %c0_i32_1 = arith.constant 0 : i32
    return %c0_i32, %c0_i32_0 : i32, i32
  }
  func.func @transform_2(%arg0: i32) -> (i32, i32) {
    %c0_i32 = arith.constant 0 : i32
    %c0_i32_0 = arith.constant 0 : i32
    %c0_i32_1 = arith.constant 0 : i32
    return %c0_i32, %c0_i32_0 : i32, i32
  }
  func.func @transform_3(%arg0: i32) -> (i32, i32, i32) {
    %c0_i32 = arith.constant 0 : i32
    %c0_i32_0 = arith.constant 0 : i32
    %c0_i32_1 = arith.constant 0 : i32
    return %arg0, %c0_i32, %c0_i32_0 : i32, i32, i32
  }
}

</mosaic_0001>

<llo_original>
// kernel: tile.8
$region0: #{tile.8}
  #allocation0 [shape = 's32[1]{0}', space=sflag, size = 0x4, scoped, tag = 'scoped memory for tile.8']
  %s0 = inlined_call_operand.vmem [shape: f32[64], index: 0, kind: input, shape index: {}]
  %s1 = inlined_call_operand.vmem [shape: f32[4,64], index: 1, kind: output, shape index: {}]
  // Predicated region
  $region2: #{tile.8} parent=0 // pred_check
    _
  $region3: #{tile.8} parent=0 // pred_check_branch
    %3 = sbr.rel (0) target = $region5
  $region4: #{tile.8} parent=0 // pred_region
    _
  $region5: #{tile.8} parent=0 // pred_fallthru
    _
  %v4 = vld [vmem:[%s0] ss:$0 sm:$0xff]
  %5 = vst [vmem:[%s1] sm:$0xf] %v4

// kernel: tile.9
$region0: #{tile.9}
  %s0 = inlined_call_operand.vmem [shape: f32[4,64], index: 0, kind: input, shape index: {}]
  %s1 = inlined_call_operand.vmem [shape: f32[1,256], index: 1, kind: output, shape index: {}]
  $region1: #{tile.9} parent=0
    #allocation0 [shape = 'u8[8192]{0}', space=vmem, size = 0x2000, scoped, tag = 'scoped mem for output reshape']
    #allocation1 [shape = 'u8[4096]{0}', space=vmem, size = 0x1000, scoped, tag = 'scoped mem for input reshape']
    %s3 = sshllo.u32 0, 4
    %v4 = vld [vmem:[%s0] sm:%s3]
    %5 = vst [vmem:[#allocation1] sm:%s3] %v4
    %s6 = smov 3
    %v7 = vld [vmem:[#allocation1] ss:$2 sm:%s6]
    %vm8 = vcmask 523264
    %9 = vst.msk [vmem:[#allocation0] ss:$8 sm:$0x3] %vm8, %v7
    %s10 = scalar_lea.vmem [#allocation1], 1
    %s11 = smov 3
    %v12 = vld [vmem:[%s10] ss:$2 sm:%s11]
    %13 = vrot.lane.b32.xlu0 %v12, 64
    %v14 = vpop.permute.xlu0 %13
    %vm15 = vcmask 1048064
    %16 = vst.msk [vmem:[#allocation0] ss:$8 sm:$0x3] %vm15, %v14
    %s18 = sshllo.u32 0, 1
    %v20 = vld [vmem:[#allocation0] sm:%s18]
    %s21 = sshllo.u32 0, 1
    %22 = vst [vmem:[%s1] sm:%s21] %v20
    %s23 = scalar_lea.vmem [#allocation0], 8
    %v24 = vld [vmem:[%s23] sm:%s18]
    %s25 = sshllo.u32 0, 1
    %s26 = scalar_lea.vmem %s1, 1
    %27 = vst [vmem:[%s26] sm:%s25] %v24

// kernel: _lambda_.1
$region0: #{_lambda_.1}
  #allocation0 [shape = 'u32[]', space=smem, size = 0x4, offset = 0x4, fixed_abs, tag = 'smem constant byte address 0x4 - core index']
  #allocation1 [shape = 'u32[144,128]{1,0:T(1,128)}', space=vmem, size = 0x12000, scoped, tag = 'internal scratch']
  %s0 = inlined_call_operand.vmem [shape: f32[2,128,256], index: 0, kind: input, shape index: {}]
  %s1 = inlined_call_operand.vmem [shape: bf16[128,256], index: 1, kind: input, shape index: {}]
  %s2 = inlined_call_operand.vmem [shape: f32[1,256], index: 2, kind: input, shape index: {}]
  %s3 = inlined_call_operand.vmem [shape: f32[2,256,256], index: 3, kind: output, shape index: {}]
  %s4 = sld [smem:[#allocation0]]
  $region45: #{_lambda_.1} parent=0
    _
  %s6 = ssub.s32 1, %s4
  %s7 = scalar_select 0, %s6, %s4
  loop: start=0, step=1, limit=4
  $region2: #{_lambda_.1} parent=0 // loop_pre_header
    _
  $region3: #{_lambda_.1} parent=0 // loop_header
    %s9 = sphi 0, %s13
    %p10 = scmp.ge.s32.totalorder %s9, 4
    %s19 = sphi 0, %s21
    %s22 = sphi 0, %s19
    %s23 = sphi 0, %s22
    %s39 = sphi 0, %s23
    %s43 = sphi 0, %s43
    %s45 = sphi 0, %s43
    %s46 = sphi 0, %s45
    %s60 = sphi 0, %s46
    %s64 = sphi 0, %s64
    %s66 = sphi 0, %s64
    %s67 = sphi 0, %s66
    %s81 = sphi 0, %s67
    %s87 = sphi 0, %s89
    %s90 = sphi 0, %s87
    %s91 = sphi 0, %s90
    %s107 = sphi 0, %s91
  $region4: #{_lambda_.1} parent=0 // loop_header_branch
    %12 = sbr.rel (%p10) target = $region8
  $region5: #{_lambda_.1} parent=0 // loop_body
    %s14 = ssub.s32 %s9, 1
    %s15 = ssub.s32 %s9, 2
    %s16 = sadd.s32 %s9, 1
    %s17 = ssub.s32 %s9, %s16
    %p18 = scmp.eq.s32.totalorder %s17, 0
    %s20 = sadd.s32 %s19, 1
    %s21 = scalar_select %p18, %s19, %s20
    %p24 = pneg %p18
    %p25 = scmp.eq.s32.totalorder %s9, 1
    %p26 = por %p24, %p25
    %p27 = scmp.ne.s32.totalorder %s19, %s22
    %p28 = scmp.eq.s32.totalorder %s9, 0
    %p29 = por %p27, %p28
    %p30 = scmp.ne.s32.totalorder %s19, %s22
    %p31 = scmp.eq.s32.totalorder %s14, 1
    %p32 = por %p30, %p31
    %p33 = scmp.ne.s32.totalorder %s22, %s23
    %p34 = scmp.eq.s32.totalorder %s14, 0
    %p35 = por %p33, %p34
    %p36 = scmp.ne.s32.totalorder %s22, %s23
    %p37 = scmp.eq.s32.totalorder %s15, 1
    %p38 = por %p36, %p37
    %p40 = scmp.ne.s32.totalorder %s23, %s39
    %p41 = scmp.eq.s32.totalorder %s15, 0
    %p42 = por %p40, %p41
    %s44 = sadd.s32 %s43, 1
    %p47 = scmp.eq.s32.totalorder %s9, 1
    %p48 = scmp.ne.s32.totalorder %s43, %s45
    %p49 = scmp.eq.s32.totalorder %s9, 0
    %p50 = por %p48, %p49
    %p51 = scmp.ne.s32.totalorder %s43, %s45
    %p52 = scmp.eq.s32.totalorder %s14, 1
    %p53 = por %p51, %p52
    %p54 = scmp.ne.s32.totalorder %s45, %s46
    %p55 = scmp.eq.s32.totalorder %s14, 0
    %p56 = por %p54, %p55
    %p57 = scmp.ne.s32.totalorder %s45, %s46
    %p58 = scmp.eq.s32.totalorder %s15, 1
    %p59 = por %p57, %p58
    %p61 = scmp.ne.s32.totalorder %s46, %s60
    %p62 = scmp.eq.s32.totalorder %s15, 0
    %p63 = por %p61, %p62
    %s65 = sadd.s32 %s64, 1
    %p68 = scmp.eq.s32.totalorder %s9, 1
    %p69 = scmp.ne.s32.totalorder %s64, %s66
    %p70 = scmp.eq.s32.totalorder %s9, 0
    %p71 = por %p69, %p70
    %p72 = scmp.ne.s32.totalorder %s64, %s66
    %p73 = scmp.eq.s32.totalorder %s14, 1
    %p74 = por %p72, %p73
    %p75 = scmp.ne.s32.totalorder %s66, %s67
    %p76 = scmp.eq.s32.totalorder %s14, 0
    %p77 = por %p75, %p76
    %p78 = scmp.ne.s32.totalorder %s66, %s67
    %p79 = scmp.eq.s32.totalorder %s15, 1
    %p80 = por %p78, %p79
    %p82 = scmp.ne.s32.totalorder %s67, %s81
    %p83 = scmp.eq.s32.totalorder %s15, 0
    %p84 = por %p82, %p83
    %s85 = ssub.s32 %s9, %s16
    %p86 = scmp.eq.s32.totalorder %s85, 0
    %s88 = sadd.s32 %s87, 1
    %s89 = scalar_select %p86, %s87, %s88
    %p92 = pneg %p86
    %p93 = scmp.eq.s32.totalorder %s9, 1
    %p94 = por %p92, %p93
    %p95 = scmp.ne.s32.totalorder %s87, %s90
    %p96 = scmp.eq.s32.totalorder %s9, 0
    %p97 = por %p95, %p96
    %p98 = scmp.ne.s32.totalorder %s87, %s90
    %p99 = scmp.eq.s32.totalorder %s14, 1
    %p100 = por %p98, %p99
    %p101 = scmp.ne.s32.totalorder %s90, %s91
    %p102 = scmp.eq.s32.totalorder %s14, 0
    %p103 = por %p101, %p102
    %p104 = scmp.ne.s32.totalorder %s90, %s91
    %p105 = scmp.eq.s32.totalorder %s15, 1
    %p106 = por %p104, %p105
    %p108 = scmp.ne.s32.totalorder %s91, %s107
    %p109 = scmp.eq.s32.totalorder %s15, 0
    %p110 = por %p108, %p109
    %p111 = scmp.le.s32.totalorder 1, %s9
    %p112 = scmp.lt.s32.totalorder %s9, 3
    %p113 = pnand %p111, %p112
    %p114 = pneg %p113
    // Predicated region
    $region9: #{_lambda_.1} parent=5 // pred_check
      _
    $region10: #{_lambda_.1} parent=5 // pred_check_branch
      %116 = sbr.rel (%p113) target = $region12
    $region11: #{_lambda_.1} parent=5 // pred_region
      %s117 = ssub.s32 %s9, 1
      // Predicated region
      $region13: #{_lambda_.1} parent=11 // pred_check
        %p118 = pneg %p56
      $region14: #{_lambda_.1} parent=11 // pred_check_branch
        %120 = sbr.rel (%p118) target = $region16
      $region15: #{_lambda_.1} parent=11 // pred_region
        _
      $region16: #{_lambda_.1} parent=11 // pred_fallthru
        _
      // Predicated region
      $region17: #{_lambda_.1} parent=11 // pred_check
        %p121 = pneg %p77
      $region18: #{_lambda_.1} parent=11 // pred_check_branch
        %123 = sbr.rel (%p121) target = $region20
      $region19: #{_lambda_.1} parent=11 // pred_region
        _
      $region20: #{_lambda_.1} parent=11 // pred_fallthru
        _
    $region12: #{_lambda_.1} parent=5 // pred_fallthru
      _
    %p124 = scmp.lt.s32.totalorder %s9, 2
    // Predicated region
    $region21: #{_lambda_.1} parent=5 // pred_check
      %p125 = pneg %p124
    $region22: #{_lambda_.1} parent=5 // pred_check_branch
      %127 = sbr.rel (%p125) target = $region24
    $region23: #{_lambda_.1} parent=5 // pred_region
      // Predicated region
      $region25: #{_lambda_.1} parent=23 // pred_check
        %p128 = pneg %p29
      $region26: #{_lambda_.1} parent=23 // pred_check_branch
        %130 = sbr.rel (%p128) target = $region28
      $region27: #{_lambda_.1} parent=23 // pred_region
        %p131 = scmp.lt.s32.totalorder %s9, 1
        %s132 = scalar_select %p131, %s9, 1
        %s133 = smul.addr %s132, 32
        %s134 = smul.addr %s133, 8
        %s135 = scalar_lea.vmem %s0, %s134
      $region28: #{_lambda_.1} parent=23 // pred_fallthru
        _
    $region24: #{_lambda_.1} parent=5 // pred_fallthru
      _
    %p136 = scmp.le.s32.totalorder 1, %s9
    %p137 = scmp.lt.s32.totalorder %s9, 3
    %p138 = pnand %p136, %p137
    %p139 = pneg %p138
    // Predicated region
    $region29: #{_lambda_.1} parent=5 // pred_check
      _
    $region30: #{_lambda_.1} parent=5 // pred_check_branch
      %141 = sbr.rel (%p138) target = $region32
    $region31: #{_lambda_.1} parent=5 // pred_region
      %s142 = ssub.s32 %s9, 1
      %p143 = scmp.lt.s32.totalorder %s14, 1
      %s144 = scalar_select %p143, %s14, 1
      %s145 = smul.addr %s144, 32
      %s146 = smul.addr %s145, 8
      %s147 = scalar_lea.vmem %s0, %s146
      %p148 = pneg %p35
      %p149 = pneg %p32
      %p150 = pneg %p56
      %p151 = pneg %p53
      %p152 = pneg %p77
      %p153 = pneg %p74
      %p154 = pneg %p103
      %p155 = pneg %p100
      %p156 = scmp.lt.s32.totalorder %s14, 1
      %s157 = scalar_select %p156, %s14, 1
      %s158 = smul.addr %s157, 64
      %s159 = smul.addr %s158, 8
      %s160 = scalar_lea.vmem %s3, %s159
      %p161 = scmp.lt.s32.totalorder %s14, 1
      %s162 = scalar_select %p161, %s14, 1
      %s163 = smul.addr %s162, 32
      %s164 = smul.addr %s163, 8
      %s165 = scalar_lea.vmem %s0, %s164
      %p166 = scmp.lt.s32.totalorder %s14, 1
      %s167 = scalar_select %p166, %s14, 1
      %s168 = smul.addr %s167, 64
      %s169 = smul.addr %s168, 8
      %s170 = scalar_lea.vmem %s3, %s169
      %v172 = vld [vmem:[%s165] sm:$0xff]
      %v173 = vld [vmem:[%s165 + $0x8] sm:$0xff]
      %v174 = vld [vmem:[%s165 + $0x10] sm:$0xff]
      %v175 = vld [vmem:[%s165 + $0x18] sm:$0xff]
      %v176 = vld [vmem:[%s165 + $0x20] sm:$0xff]
      %v177 = vld [vmem:[%s165 + $0x28] sm:$0xff]
      %v178 = vld [vmem:[%s165 + $0x30] sm:$0xff]
      %v179 = vld [vmem:[%s165 + $0x38] sm:$0xff]
      %v180 = vld [vmem:[%s165 + $0x40] sm:$0xff]
      %v181 = vld [vmem:[%s165 + $0x48] sm:$0xff]
      %v182 = vld [vmem:[%s165 + $0x50] sm:$0xff]
      %v183 = vld [vmem:[%s165 + $0x58] sm:$0xff]
      %v184 = vld [vmem:[%s165 + $0x60] sm:$0xff]
      %v185 = vld [vmem:[%s165 + $0x68] sm:$0xff]
      %v186 = vld [vmem:[%s165 + $0x70] sm:$0xff]
      %v187 = vld [vmem:[%s165 + $0x78] sm:$0xff]
      %v188 = vld [vmem:[%s165 + $0x80] sm:$0xff]
      %v189 = vld [vmem:[%s165 + $0x88] sm:$0xff]
      %v190 = vld [vmem:[%s165 + $0x90] sm:$0xff]
      %v191 = vld [vmem:[%s165 + $0x98] sm:$0xff]
      %v192 = vld [vmem:[%s165 + $0xa0] sm:$0xff]
      %v193 = vld [vmem:[%s165 + $0xa8] sm:$0xff]
      %v194 = vld [vmem:[%s165 + $0xb0] sm:$0xff]
      %v195 = vld [vmem:[%s165 + $0xb8] sm:$0xff]
      %v196 = vld [vmem:[%s165 + $0xc0] sm:$0xff]
      %v197 = vld [vmem:[%s165 + $0xc8] sm:$0xff]
      %v198 = vld [vmem:[%s165 + $0xd0] sm:$0xff]
      %v199 = vld [vmem:[%s165 + $0xd8] sm:$0xff]
      %v200 = vld [vmem:[%s165 + $0xe0] sm:$0xff]
      %v201 = vld [vmem:[%s165 + $0xe8] sm:$0xff]
      %v202 = vld [vmem:[%s165 + $0xf0] sm:$0xff]
      %v203 = vld [vmem:[%s165 + $0xf8] sm:$0xff]
      %v204 = vpack.c.bf16 %v174, %v172
      %v205 = vpack.c.bf16 %v175, %v173
      %v206 = vpack.c.bf16 %v178, %v176
      %v207 = vpack.c.bf16 %v179, %v177
      %v208 = vpack.c.bf16 %v182, %v180
      %v209 = vpack.c.bf16 %v183, %v181
      %v210 = vpack.c.bf16 %v186, %v184
      %v211 = vpack.c.bf16 %v187, %v185
      %v212 = vpack.c.bf16 %v190, %v188
      %v213 = vpack.c.bf16 %v191, %v189
      %v214 = vpack.c.bf16 %v194, %v192
      %v215 = vpack.c.bf16 %v195, %v193
      %v216 = vpack.c.bf16 %v198, %v196
      %v217 = vpack.c.bf16 %v199, %v197
      %v218 = vpack.c.bf16 %v202, %v200
      %v219 = vpack.c.bf16 %v203, %v201
      %v220 = vld [vmem:[%s1] sm:$0xff]
      %v221 = vld [vmem:[%s1 + $0x8] sm:$0xff]
      %v222 = vld [vmem:[%s1 + $0x10] sm:$0xff]
      %v223 = vld [vmem:[%s1 + $0x18] sm:$0xff]
      %v224 = vld [vmem:[%s1 + $0x20] sm:$0xff]
      %v225 = vld [vmem:[%s1 + $0x28] sm:$0xff]
      %v226 = vld [vmem:[%s1 + $0x30] sm:$0xff]
      %v227 = vld [vmem:[%s1 + $0x38] sm:$0xff]
      %v228 = vld [vmem:[%s1 + $0x40] sm:$0xff]
      %v229 = vld [vmem:[%s1 + $0x48] sm:$0xff]
      %v230 = vld [vmem:[%s1 + $0x50] sm:$0xff]
      %v231 = vld [vmem:[%s1 + $0x58] sm:$0xff]
      %v232 = vld [vmem:[%s1 + $0x60] sm:$0xff]
      %v233 = vld [vmem:[%s1 + $0x68] sm:$0xff]
      %v234 = vld [vmem:[%s1 + $0x70] sm:$0xff]
      %v235 = vld [vmem:[%s1 + $0x78] sm:$0xff]
      %v236 = vld [vmem:[%s2] sm:$0x3]
      %v238 = vlaneseq
      %v239 = vshrl.u32 %v238, 7
      %v240 = vsub.s32 0, %v239
      %v241 = vrot.slane %v236, %v240
      %v242 = vlaneseq
      %v243 = vshrl.u32 %v242, 7
      %v244 = vsub.s32 1, %v243
      %v245 = vrot.slane %v236, %v244
      %248 = vxpose.xlu0.c.b16.start [1/8] %v204, 128
      %249 = vxpose.xlu0.c.b16.cont [2/8] %v206, 128
      %250 = vxpose.xlu0.c.b16.cont [3/8] %v208, 128
      %251 = vxpose.xlu0.c.b16.cont [4/8] %v210, 128
      %252 = vxpose.xlu0.c.b16.cont [5/8] %v212, 128
      %253 = vxpose.xlu0.c.b16.cont [6/8] %v214, 128
      %254 = vxpose.xlu0.c.b16.cont [7/8] %v216, 128
      %255 = vxpose.xlu0.c.b16.end [8/8] %v218, 128
      %v256 = vpop.trf.xlu0
      %v257 = vpop.trf.xlu0
      %v258 = vpop.trf.xlu0
      %v259 = vpop.trf.xlu0
      %v260 = vpop.trf.xlu0
      %v261 = vpop.trf.xlu0
      %v262 = vpop.trf.xlu0
      %v263 = vpop.trf.xlu0
      %264 = vxpose.xlu0.c.b16.start [1/8] %v205, 128
      %265 = vxpose.xlu0.c.b16.cont [2/8] %v207, 128
      %266 = vxpose.xlu0.c.b16.cont [3/8] %v209, 128
      %267 = vxpose.xlu0.c.b16.cont [4/8] %v211, 128
      %268 = vxpose.xlu0.c.b16.cont [5/8] %v213, 128
      %269 = vxpose.xlu0.c.b16.cont [6/8] %v215, 128
      %270 = vxpose.xlu0.c.b16.cont [7/8] %v217, 128
      %271 = vxpose.xlu0.c.b16.end [8/8] %v219, 128
      %v272 = vpop.trf.xlu0
      %v273 = vpop.trf.xlu0
      %v274 = vpop.trf.xlu0
      %v275 = vpop.trf.xlu0
      %v276 = vpop.trf.xlu0
      %v277 = vpop.trf.xlu0
      %v278 = vpop.trf.xlu0
      %v279 = vpop.trf.xlu0
      %v296 = vunpack.c.l.b16 %v220
      %v297 = vunpack.c.h.b16 %v220
      %v298 = vunpack.c.l.b16 %v221
      %v299 = vunpack.c.h.b16 %v221
      %v300 = vunpack.c.l.b16 %v222
      %v301 = vunpack.c.h.b16 %v222
      %v302 = vunpack.c.l.b16 %v223
      %v303 = vunpack.c.h.b16 %v223
      %v304 = vunpack.c.l.b16 %v224
      %v305 = vunpack.c.h.b16 %v224
      %v306 = vunpack.c.l.b16 %v225
      %v307 = vunpack.c.h.b16 %v225
      %v308 = vunpack.c.l.b16 %v226
      %v309 = vunpack.c.h.b16 %v226
      %v310 = vunpack.c.l.b16 %v227
      %v311 = vunpack.c.h.b16 %v227
      %v312 = vunpack.c.l.b16 %v228
      %v313 = vunpack.c.h.b16 %v228
      %v314 = vunpack.c.l.b16 %v229
      %v315 = vunpack.c.h.b16 %v229
      %v316 = vunpack.c.l.b16 %v230
      %v317 = vunpack.c.h.b16 %v230
      %v318 = vunpack.c.l.b16 %v231
      %v319 = vunpack.c.h.b16 %v231
      %v320 = vunpack.c.l.b16 %v232
      %v321 = vunpack.c.h.b16 %v232
      %v322 = vunpack.c.l.b16 %v233
      %v323 = vunpack.c.h.b16 %v233
      %v324 = vunpack.c.l.b16 %v234
      %v325 = vunpack.c.h.b16 %v234
      %v326 = vunpack.c.l.b16 %v235
      %v327 = vunpack.c.h.b16 %v235
      %v328 = vpack.c.b16 %v298, %v296
      %v329 = vpack.c.b16 %v299, %v297
      %v330 = vpack.c.b16 %v302, %v300
      %v331 = vpack.c.b16 %v303, %v301
      %v332 = vpack.c.b16 %v306, %v304
      %v333 = vpack.c.b16 %v307, %v305
      %v334 = vpack.c.b16 %v310, %v308
      %v335 = vpack.c.b16 %v311, %v309
      %v336 = vpack.c.b16 %v314, %v312
      %v337 = vpack.c.b16 %v315, %v313
      %v338 = vpack.c.b16 %v318, %v316
      %v339 = vpack.c.b16 %v319, %v317
      %v340 = vpack.c.b16 %v322, %v320
      %v341 = vpack.c.b16 %v323, %v321
      %v342 = vpack.c.b16 %v326, %v324
      %v343 = vpack.c.b16 %v327, %v325
      %360 = vmatprep.subr.bf16.mxu0 %v329
      %361 = vmatpush1.bf16.msra.mxu0 %v328
      %362 = vmatprep.subr.bf16.mxu0 %v331
      %363 = vmatpush1.bf16.msra.mxu0 %v330
      %364 = vmatprep.subr.bf16.mxu0 %v333
      %365 = vmatpush1.bf16.msra.mxu0 %v332
      %366 = vmatprep.subr.bf16.mxu0 %v335
      %367 = vmatpush1.bf16.msra.mxu0 %v334
      %368 = vmatprep.subr.bf16.mxu0 %v337
      %369 = vmatpush1.bf16.msra.mxu0 %v336
      %370 = vmatprep.subr.bf16.mxu0 %v339
      %371 = vmatpush1.bf16.msra.mxu0 %v338
      %372 = vmatprep.subr.bf16.mxu0 %v341
      %373 = vmatpush1.bf16.msra.mxu0 %v340
      %374 = vmatprep.subr.bf16.mxu0 %v343
      %375 = vmatpush1.bf16.msra.mxu0 %v342
      %376 = vmatprep.subr.bf16.mxu0 0
      %377 = vmatpush1.bf16.msra.mxu0 0
      %378 = vmatprep.subr.bf16.mxu0 0
      %379 = vmatpush1.bf16.msra.mxu0 0
      %380 = vmatprep.subr.bf16.mxu0 0
      %381 = vmatpush1.bf16.msra.mxu0 0
      %382 = vmatprep.subr.bf16.mxu0 0
      %383 = vmatpush1.bf16.msra.mxu0 0
      %384 = vmatprep.subr.bf16.mxu0 0
      %385 = vmatpush1.bf16.msra.mxu0 0
      %386 = vmatprep.subr.bf16.mxu0 0
      %387 = vmatpush1.bf16.msra.mxu0 0
      %388 = vmatprep.subr.bf16.mxu0 0
      %389 = vmatpush1.bf16.msra.mxu0 0
      %390 = vmatprep.subr.bf16.mxu0 0
      %391 = vmatpush1.bf16.msra.mxu0 0
      %392 = vmatprep.mubr.bf16.mxu0 0
      %393 = vmatmul.mubr.bf16.gmra.mrb[0].mxu0 %v256
      %v394 = vpop.f32.mrb[0].mxu0
      %v395 = vadd.f32 %v241, %v394
      %v396 = vpop.f32.mrb[0].mxu0
      %v397 = vadd.f32 %v245, %v396
      %v398 = vpop.f32.mrb[0].mxu0
      %v399 = vadd.f32 %v241, %v398
      %v400 = vpop.f32.mrb[0].mxu0
      %v401 = vadd.f32 %v245, %v400
      %402 = vmatprep.mubr.bf16.mxu0 0
      %403 = vmatmul.mubr.bf16.gmra.mrb[0].mxu0 %v257
      %v404 = vpop.f32.mrb[0].mxu0
      %v405 = vadd.f32 %v241, %v404
      %v406 = vpop.f32.mrb[0].mxu0
      %v407 = vadd.f32 %v245, %v406
      %v408 = vpop.f32.mrb[0].mxu0
      %v409 = vadd.f32 %v241, %v408
      %v410 = vpop.f32.mrb[0].mxu0
      %v411 = vadd.f32 %v245, %v410
      %412 = vmatprep.mubr.bf16.mxu0 0
      %413 = vmatmul.mubr.bf16.gmra.mrb[0].mxu0 %v258
      %v414 = vpop.f32.mrb[0].mxu0
      %v415 = vadd.f32 %v241, %v414
      %v416 = vpop.f32.mrb[0].mxu0
      %v417 = vadd.f32 %v245, %v416
      %v418 = vpop.f32.mrb[0].mxu0
      %v419 = vadd.f32 %v241, %v418
      %v420 = vpop.f32.mrb[0].mxu0
      %v421 = vadd.f32 %v245, %v420
      %422 = vmatprep.mubr.bf16.mxu0 0
      %423 = vmatmul.mubr.bf16.gmra.mrb[0].mxu0 %v259
      %v424 = vpop.f32.mrb[0].mxu0
      %v425 = vadd.f32 %v241, %v424
      %v426 = vpop.f32.mrb[0].mxu0
      %v427 = vadd.f32 %v245, %v426
      %v428 = vpop.f32.mrb[0].mxu0
      %v429 = vadd.f32 %v241, %v428
      %v430 = vpop.f32.mrb[0].mxu0
      %v431 = vadd.f32 %v245, %v430
      %432 = vmatprep.mubr.bf16.mxu0 0
      %433 = vmatmul.mubr.bf16.gmra.mrb[0].mxu0 %v260
      %v434 = vpop.f32.mrb[0].mxu0
      %v435 = vadd.f32 %v241, %v434
      %v436 = vpop.f32.mrb[0].mxu0
      %v437 = vadd.f32 %v245, %v436
      %v438 = vpop.f32.mrb[0].mxu0
      %v439 = vadd.f32 %v241, %v438
      %v440 = vpop.f32.mrb[0].mxu0
      %v441 = vadd.f32 %v245, %v440
      %442 = vmatprep.mubr.bf16.mxu0 0
      %443 = vmatmul.mubr.bf16.gmra.mrb[0].mxu0 %v261
      %v444 = vpop.f32.mrb[0].mxu0
      %v445 = vadd.f32 %v241, %v444
      %v446 = vpop.f32.mrb[0].mxu0
      %v447 = vadd.f32 %v245, %v446
      %v448 = vpop.f32.mrb[0].mxu0
      %v449 = vadd.f32 %v241, %v448
      %v450 = vpop.f32.mrb[0].mxu0
      %v451 = vadd.f32 %v245, %v450
      %452 = vmatprep.mubr.bf16.mxu0 0
      %453 = vmatmul.mubr.bf16.gmra.mrb[0].mxu0 %v262
      %v454 = vpop.f32.mrb[0].mxu0
      %v455 = vadd.f32 %v241, %v454
      %v456 = vpop.f32.mrb[0].mxu0
      %v457 = vadd.f32 %v245, %v456
      %v458 = vpop.f32.mrb[0].mxu0
      %v459 = vadd.f32 %v241, %v458
      %v460 = vpop.f32.mrb[0].mxu0
      %v461 = vadd.f32 %v245, %v460
      %462 = vmatprep.mubr.bf16.mxu0 0
      %463 = vmatmul.mubr.bf16.gmra.mrb[0].mxu0 %v263
      %v464 = vpop.f32.mrb[0].mxu0
      %v465 = vadd.f32 %v241, %v464
      %v466 = vpop.f32.mrb[0].mxu0
      %v467 = vadd.f32 %v245, %v466
      %v468 = vpop.f32.mrb[0].mxu0
      %v469 = vadd.f32 %v241, %v468
      %v470 = vpop.f32.mrb[0].mxu0
      %v471 = vadd.f32 %v245, %v470
      %472 = vmatprep.mubr.bf16.mxu0 0
      %473 = vmatmul.mubr.bf16.gmra.mrb[0].mxu0 %v272
      %v474 = vpop.f32.mrb[0].mxu0
      %v475 = vadd.f32 %v241, %v474
      %v476 = vpop.f32.mrb[0].mxu0
      %v477 = vadd.f32 %v245, %v476
      %v478 = vpop.f32.mrb[0].mxu0
      %v479 = vadd.f32 %v241, %v478
      %v480 = vpop.f32.mrb[0].mxu0
      %v481 = vadd.f32 %v245, %v480
      %482 = vmatprep.mubr.bf16.mxu0 0
      %483 = vmatmul.mubr.bf16.gmra.mrb[0].mxu0 %v273
      %v484 = vpop.f32.mrb[0].mxu0
      %v485 = vadd.f32 %v241, %v484
      %v486 = vpop.f32.mrb[0].mxu0
      %v487 = vadd.f32 %v245, %v486
      %v488 = vpop.f32.mrb[0].mxu0
      %v489 = vadd.f32 %v241, %v488
      %v490 = vpop.f32.mrb[0].mxu0
      %v491 = vadd.f32 %v245, %v490
      %492 = vmatprep.mubr.bf16.mxu0 0
      %493 = vmatmul.mubr.bf16.gmra.mrb[0].mxu0 %v274
      %v494 = vpop.f32.mrb[0].mxu0
      %v495 = vadd.f32 %v241, %v494
      %v496 = vpop.f32.mrb[0].mxu0
      %v497 = vadd.f32 %v245, %v496
      %v498 = vpop.f32.mrb[0].mxu0
      %v499 = vadd.f32 %v241, %v498
      %v500 = vpop.f32.mrb[0].mxu0
      %v501 = vadd.f32 %v245, %v500
      %502 = vmatprep.mubr.bf16.mxu0 0
      %503 = vmatmul.mubr.bf16.gmra.mrb[0].mxu0 %v275
      %v504 = vpop.f32.mrb[0].mxu0
      %v505 = vadd.f32 %v241, %v504
      %v506 = vpop.f32.mrb[0].mxu0
      %v507 = vadd.f32 %v245, %v506
      %v508 = vpop.f32.mrb[0].mxu0
      %v509 = vadd.f32 %v241, %v508
      %v510 = vpop.f32.mrb[0].mxu0
      %v511 = vadd.f32 %v245, %v510
      %512 = vmatprep.mubr.bf16.mxu0 0
      %513 = vmatmul.mubr.bf16.gmra.mrb[0].mxu0 %v276
      %v514 = vpop.f32.mrb[0].mxu0
      %v515 = vadd.f32 %v241, %v514
      %v516 = vpop.f32.mrb[0].mxu0
      %v517 = vadd.f32 %v245, %v516
      %v518 = vpop.f32.mrb[0].mxu0
      %v519 = vadd.f32 %v241, %v518
      %v520 = vpop.f32.mrb[0].mxu0
      %v521 = vadd.f32 %v245, %v520
      %522 = vmatprep.mubr.bf16.mxu0 0
      %523 = vmatmul.mubr.bf16.gmra.mrb[0].mxu0 %v277
      %v524 = vpop.f32.mrb[0].mxu0
      %v525 = vadd.f32 %v241, %v524
      %v526 = vpop.f32.mrb[0].mxu0
      %v527 = vadd.f32 %v245, %v526
      %v528 = vpop.f32.mrb[0].mxu0
      %v529 = vadd.f32 %v241, %v528
      %v530 = vpop.f32.mrb[0].mxu0
      %v531 = vadd.f32 %v245, %v530
      %532 = vmatprep.mubr.bf16.mxu0 0
      %533 = vmatmul.mubr.bf16.gmra.mrb[0].mxu0 %v278
      %v534 = vpop.f32.mrb[0].mxu0
      %v535 = vadd.f32 %v241, %v534
      %v536 = vpop.f32.mrb[0].mxu0
      %v537 = vadd.f32 %v245, %v536
      %v538 = vpop.f32.mrb[0].mxu0
      %v539 = vadd.f32 %v241, %v538
      %v540 = vpop.f32.mrb[0].mxu0
      %v541 = vadd.f32 %v245, %v540
      %542 = vmatprep.mubr.bf16.mxu0 0
      %543 = vmatmul.mubr.bf16.gmra.mrb[0].mxu0 %v279
      %v544 = vpop.f32.mrb[0].mxu0
      %v545 = vadd.f32 %v241, %v544
      %v546 = vpop.f32.mrb[0].mxu0
      %v547 = vadd.f32 %v245, %v546
      %v548 = vpop.f32.mrb[0].mxu0
      %v549 = vadd.f32 %v241, %v548
      %v550 = vpop.f32.mrb[0].mxu0
      %v551 = vadd.f32 %v245, %v550
      %552 = vdwg.mxu0
      %553 = vst [vmem:[%s170] sm:$0xff] %v395
      %554 = vst [vmem:[%s170 + $0x8] sm:$0xff] %v397
      %555 = vst [vmem:[%s170 + $0x10] sm:$0xff] %v399
      %556 = vst [vmem:[%s170 + $0x18] sm:$0xff] %v401
      %557 = vst [vmem:[%s170 + $0x20] sm:$0xff] %v405
      %558 = vst [vmem:[%s170 + $0x28] sm:$0xff] %v407
      %559 = vst [vmem:[%s170 + $0x30] sm:$0xff] %v409
      %560 = vst [vmem:[%s170 + $0x38] sm:$0xff] %v411
      %561 = vst [vmem:[%s170 + $0x40] sm:$0xff] %v415
      %562 = vst [vmem:[%s170 + $0x48] sm:$0xff] %v417
      %563 = vst [vmem:[%s170 + $0x50] sm:$0xff] %v419
      %564 = vst [vmem:[%s170 + $0x58] sm:$0xff] %v421
      %565 = vst [vmem:[%s170 + $0x60] sm:$0xff] %v425
      %566 = vst [vmem:[%s170 + $0x68] sm:$0xff] %v427
      %567 = vst [vmem:[%s170 + $0x70] sm:$0xff] %v429
      %568 = vst [vmem:[%s170 + $0x78] sm:$0xff] %v431
      %569 = vst [vmem:[%s170 + $0x80] sm:$0xff] %v435
      %570 = vst [vmem:[%s170 + $0x88] sm:$0xff] %v437
      %571 = vst [vmem:[%s170 + $0x90] sm:$0xff] %v439
      %572 = vst [vmem:[%s170 + $0x98] sm:$0xff] %v441
      %573 = vst [vmem:[%s170 + $0xa0] sm:$0xff] %v445
      %574 = vst [vmem:[%s170 + $0xa8] sm:$0xff] %v447
      %575 = vst [vmem:[%s170 + $0xb0] sm:$0xff] %v449
      %576 = vst [vmem:[%s170 + $0xb8] sm:$0xff] %v451
      %577 = vst [vmem:[%s170 + $0xc0] sm:$0xff] %v455
      %578 = vst [vmem:[%s170 + $0xc8] sm:$0xff] %v457
      %579 = vst [vmem:[%s170 + $0xd0] sm:$0xff] %v459
      %580 = vst [vmem:[%s170 + $0xd8] sm:$0xff] %v461
      %581 = vst [vmem:[%s170 + $0xe0] sm:$0xff] %v465
      %582 = vst [vmem:[%s170 + $0xe8] sm:$0xff] %v467
      %583 = vst [vmem:[%s170 + $0xf0] sm:$0xff] %v469
      %584 = vst [vmem:[%s170 + $0xf8] sm:$0xff] %v471
      %585 = vst [vmem:[%s170 + $0x100] sm:$0xff] %v475
      %586 = vst [vmem:[%s170 + $0x108] sm:$0xff] %v477
      %587 = vst [vmem:[%s170 + $0x110] sm:$0xff] %v479
      %588 = vst [vmem:[%s170 + $0x118] sm:$0xff] %v481
      %589 = vst [vmem:[%s170 + $0x120] sm:$0xff] %v485
      %590 = vst [vmem:[%s170 + $0x128] sm:$0xff] %v487
      %591 = vst [vmem:[%s170 + $0x130] sm:$0xff] %v489
      %592 = vst [vmem:[%s170 + $0x138] sm:$0xff] %v491
      %593 = vst [vmem:[%s170 + $0x140] sm:$0xff] %v495
      %594 = vst [vmem:[%s170 + $0x148] sm:$0xff] %v497
      %595 = vst [vmem:[%s170 + $0x150] sm:$0xff] %v499
      %596 = vst [vmem:[%s170 + $0x158] sm:$0xff] %v501
      %597 = vst [vmem:[%s170 + $0x160] sm:$0xff] %v505
      %598 = vst [vmem:[%s170 + $0x168] sm:$0xff] %v507
      %599 = vst [vmem:[%s170 + $0x170] sm:$0xff] %v509
      %600 = vst [vmem:[%s170 + $0x178] sm:$0xff] %v511
      %601 = vst [vmem:[%s170 + $0x180] sm:$0xff] %v515
      %602 = vst [vmem:[%s170 + $0x188] sm:$0xff] %v517
      %603 = vst [vmem:[%s170 + $0x190] sm:$0xff] %v519
      %604 = vst [vmem:[%s170 + $0x198] sm:$0xff] %v521
      %605 = vst [vmem:[%s170 + $0x1a0] sm:$0xff] %v525
      %606 = vst [vmem:[%s170 + $0x1a8] sm:$0xff] %v527
      %607 = vst [vmem:[%s170 + $0x1b0] sm:$0xff] %v529
      %608 = vst [vmem:[%s170 + $0x1b8] sm:$0xff] %v531
      %609 = vst [vmem:[%s170 + $0x1c0] sm:$0xff] %v535
      %610 = vst [vmem:[%s170 + $0x1c8] sm:$0xff] %v537
      %611 = vst [vmem:[%s170 + $0x1d0] sm:$0xff] %v539
      %612 = vst [vmem:[%s170 + $0x1d8] sm:$0xff] %v541
      %613 = vst [vmem:[%s170 + $0x1e0] sm:$0xff] %v545
      %614 = vst [vmem:[%s170 + $0x1e8] sm:$0xff] %v547
      %615 = vst [vmem:[%s170 + $0x1f0] sm:$0xff] %v549
      %616 = vst [vmem:[%s170 + $0x1f8] sm:$0xff] %v551
      %p617 = scmp.lt.s32.totalorder %s14, 1
      %s618 = scalar_select %p617, %s14, 1
      %s619 = smul.addr %s618, 64
      %s620 = smul.addr %s619, 8
      %s621 = scalar_lea.vmem %s3, %s620
      // Predicated region
      $region33: #{_lambda_.1} parent=31 // pred_check
        %p622 = pneg %p100
      $region34: #{_lambda_.1} parent=31 // pred_check_branch
        %624 = sbr.rel (%p622) target = $region36
      $region35: #{_lambda_.1} parent=31 // pred_region
        _
      $region36: #{_lambda_.1} parent=31 // pred_fallthru
        _
    $region32: #{_lambda_.1} parent=5 // pred_fallthru
      _
    %p625 = scmp.le.s32.totalorder 2, %s9
    // Predicated region
    $region37: #{_lambda_.1} parent=5 // pred_check
      %p626 = pneg %p625
    $region38: #{_lambda_.1} parent=5 // pred_check_branch
      %628 = sbr.rel (%p626) target = $region40
    $region39: #{_lambda_.1} parent=5 // pred_region
      %s629 = ssub.s32 %s9, 2
      // Predicated region
      $region41: #{_lambda_.1} parent=39 // pred_check
        %p630 = pneg %p106
      $region42: #{_lambda_.1} parent=39 // pred_check_branch
        %632 = sbr.rel (%p630) target = $region44
      $region43: #{_lambda_.1} parent=39 // pred_region
        %p633 = scmp.lt.s32.totalorder %s15, 1
        %s634 = scalar_select %p633, %s15, 1
        %s635 = smul.addr %s634, 64
        %s636 = smul.addr %s635, 8
        %s637 = scalar_lea.vmem %s3, %s636
      $region44: #{_lambda_.1} parent=39 // pred_fallthru
        _
    $region40: #{_lambda_.1} parent=5 // pred_fallthru
      _
  $region6: #{_lambda_.1} parent=0 // loop_footer
    %s13 = sadd.s32 1, %s9
  $region7: #{_lambda_.1} parent=0 // loop_footer_branch
    %8 = sbr.rel target = $region3
  $region8: #{_lambda_.1} parent=0 // loop_exit
    _

</llo_original>
